<compile_context>
chip_gen: v7x
topology: tpu7x:2x2x1
jax: 0.10.0
libtpu: 0.0.40
codegen_flags: <defaults>
</compile_context>

<pallas_src>
import jax
import jax.numpy as jnp
from jax import lax
from jax.experimental import pallas as pl
from jax.experimental.pallas import tpu as pltpu


def _round_up(x, m):
    return (x + m - 1) // m * m


def _choose_tile(B, D, itemsize):
    if B <= 256:
        return _round_up(B, 8)
    # Largest MXU-friendly square tile whose double-buffered feature blocks
    # plus the f32 gram tile / mask temporaries stay well under v7x VMEM.
    budget = 24 << 20
    tile = 512
    while tile > 128 and (4 * tile * D * itemsize + 8 * tile * tile) > budget:
        tile //= 2
    return tile


def _normalize_kernel(x_ref, o_ref):
    # F.normalize(x, p=2, dim=1): x / max(||x||, 1e-12) == x * rsqrt(max(ss, 1e-24))
    x = x_ref[...].astype(jnp.float32)
    ss = jnp.sum(x * x, axis=1, keepdims=True)
    inv = lax.rsqrt(jnp.maximum(ss, 1e-24))
    o_ref[...] = (x * inv).astype(o_ref.dtype)


def _opl_gram_kernel(bi_ref, bj_ref, feat_i_ref, feat_j_ref,
                     lab_i_ref, lab_j_ref, sums_ref):
    # bi_ref/bj_ref: (T,) i32 SMEM scalar-prefetch block-index tables
    # feat_i_ref:    (TILE, D) normalized features (row block)
    # feat_j_ref:    (TILE, D) normalized features (col block)
    # lab_i_ref:     (TILE, 1) i32,  lab_j_ref: (1, TILE) i32
    # sums_ref:      (1, 2) f32 SMEM output [pos_sum, neg_sum], grid-resident
    t = pl.program_id(0)

    @pl.when(t == 0)
    def _init():
        sums_ref[0, 0] = 0.0
        sums_ref[0, 1] = 0.0

    xi = feat_i_ref[...]
    xj = feat_j_ref[...]
    # Gram tile on the MXU: contract last dims of both operands (no transposed
    # copy materialized), accumulate in f32.
    dot = lax.dot_general(
        xi, xj,
        dimension_numbers=(((1,), (1,)), ((), ())),
        preferred_element_type=jnp.float32)                  # (TILE, TILE) f32

    same = lab_i_ref[...] == lab_j_ref[...]                  # (TILE, TILE) bool

    bi = bi_ref[t]
    bj = bj_ref[t]
    is_diag_blk = bi == bj

    # Diagonal entries only exist inside diagonal blocks (bi == bj).
    ti, tj = dot.shape
    local_diag = (lax.broadcasted_iota(jnp.int32, (ti, tj), 0) ==
                  lax.broadcasted_iota(jnp.int32, (ti, tj), 1))
    diag = jnp.logical_and(is_diag_blk, local_diag)

    pos = jnp.logical_and(same, jnp.logical_not(diag))
    neg = jnp.logical_not(same)

    pos_sum = jnp.sum(jnp.where(pos, dot, 0.0))
    neg_sum = jnp.sum(jnp.where(neg, jnp.abs(dot), 0.0))

    # Off-diagonal tiles also stand in for their mirrored (bj, bi) tile.
    weight = jnp.where(is_diag_blk, 1.0, 2.0)
    sums_ref[0, 0] += weight * pos_sum
    sums_ref[0, 1] += weight * neg_sum


def orthogonal_projection_loss(features, labels, gamma=0.5):
    """Pallas implementation of OrthogonalProjectionLoss.forward.

    features: (B, D) float array (any float dtype; gram runs in that dtype
              with f32 accumulation)
    labels:   (B,)   int array
    returns:  scalar float32 loss
    """
    B, D = features.shape
    itemsize = jnp.dtype(features.dtype).itemsize

    tile = _choose_tile(B, D, itemsize)
    b_pad = _round_up(B, tile)
    n_blk = b_pad // tile

    feats = features
    lab = labels.astype(jnp.int32)
    if b_pad != B:
        # Padded rows are zero -> zero after normalization -> contribute 0 to
        # both sums; counts below use the true B, so no validity mask needed.
        feats = jnp.pad(features, ((0, b_pad - B), (0, 0)))
        lab_pad = jnp.pad(lab, (0, b_pad - B))
    else:
        lab_pad = lab

    # Explicit scoped-VMEM budget: 2 feature inputs x 2 buffers x (tile, D)
    # plus the (tile, tile) f32 gram + mask temporaries, with headroom.
    per_step = 4 * tile * D * itemsize + 4 * tile * tile * 4
    vmem_limit = int(min(max(2 * per_step + (8 << 20), 32 << 20), 60 << 20))

    # ---- Pass 1: one mem-bound normalization sweep over the features. ----
    feats_n = pl.pallas_call(
        _normalize_kernel,
        out_shape=jax.ShapeDtypeStruct((b_pad, D), feats.dtype),
        grid=(n_blk,),
        in_specs=[pl.BlockSpec((tile, D), lambda i: (i, 0))],
        out_specs=pl.BlockSpec((tile, D), lambda i: (i, 0)),
        compiler_params=pltpu.CompilerParams(
            dimension_semantics=("parallel",),
            vmem_limit_bytes=vmem_limit),
    )(feats)

    # ---- Pass 2: upper-triangle gram tiles + masked sums. ----
    # i-major order keeps the feat_i block resident across consecutive steps;
    # only the feat_j stream is re-fetched.
    tri = [(i, j) for i in range(n_blk) for j in range(i, n_blk)]
    bi_tbl = jnp.asarray([p[0] for p in tri], dtype=jnp.int32)
    bj_tbl = jnp.asarray([p[1] for p in tri], dtype=jnp.int32)
    n_steps = len(tri)

    lab_col = lab_pad.reshape(b_pad, 1)
    lab_row = lab_pad.reshape(1, b_pad)

    sums = pl.pallas_call(
        _opl_gram_kernel,
        out_shape=jax.ShapeDtypeStruct((1, 2), jnp.float32),
        grid_spec=pltpu.PrefetchScalarGridSpec(
            num_scalar_prefetch=2,
            grid=(n_steps,),
            in_specs=[
                pl.BlockSpec((tile, D), lambda t, bi, bj: (bi[t], 0)),  # rows
                pl.BlockSpec((tile, D), lambda t, bi, bj: (bj[t], 0)),  # cols
                pl.BlockSpec((tile, 1), lambda t, bi, bj: (bi[t], 0)),  # row labels
                pl.BlockSpec((1, tile), lambda t, bi, bj: (0, bj[t])),  # col labels
            ],
            out_specs=pl.BlockSpec((1, 2), lambda t, bi, bj: (0, 0),
                                   memory_space=pltpu.MemorySpace.SMEM),
        ),
        compiler_params=pltpu.CompilerParams(
            # Single grid-resident SMEM accumulator -> sequential grid.
            dimension_semantics=("arbitrary",),
            vmem_limit_bytes=vmem_limit),
    )(bi_tbl, bj_tbl, feats_n, feats_n, lab_col, lab_row)

    # Pair counts depend only on labels (not on dot): compute once here.
    lab_c = lab.reshape(B, 1)
    same_count = jnp.sum((lab_c == lab_c.T).astype(jnp.float32))
    pos_cnt = same_count - jnp.float32(B)          # same-label pairs, no diag
    neg_cnt = jnp.float32(B * B) - same_count      # different-label pairs

    pos_mean = sums[0, 0] / (pos_cnt + 1e-6)
    neg_mean = sums[0, 1] / (neg_cnt + 1e-6)
    return 1.0 - pos_mean + jnp.float32(gamma) * neg_mean


def _reference(features, labels, gamma=0.5):
    # Pure-JAX reference mirroring the PyTorch forward.
    x = features.astype(jnp.float32)
    xn = x / jnp.maximum(jnp.linalg.norm(x, axis=1, keepdims=True), 1e-12)
    lab = labels.reshape(-1, 1)
    mask = lab == lab.T
    eye = jnp.eye(mask.shape[0], dtype=bool)
    mask_pos = jnp.where(mask & ~eye, 1.0, 0.0)
    mask_neg = jnp.where(~mask, 1.0, 0.0)
    dot = xn @ xn.T
    pos = jnp.sum(mask_pos * dot) / (jnp.sum(mask_pos) + 1e-6)
    neg = jnp.sum(jnp.abs(mask_neg * dot)) / (jnp.sum(mask_neg) + 1e-6)
    return 1.0 - pos + gamma * neg


if __name__ == "__main__":
    key = jax.random.PRNGKey(0)
    kf, kl = jax.random.split(key)

    # Small shapes consistent with the module: batch=8, hidden=32.
    B, D = 8, 32
    features = jax.random.normal(kf, (B, D), dtype=jnp.float32)
    labels = jax.random.randint(kl, (B,), 0, 3, dtype=jnp.int32)

    loss = orthogonal_projection_loss(features, labels, gamma=0.5)
    loss = jax.block_until_ready(loss)
    ref = _reference(features, labels, gamma=0.5)
    assert jnp.allclose(loss, ref, atol=1e-5, rtol=1e-5), (loss, ref)

    # Second check: batch not a multiple of the tile (exercises zero-row
    # padding and the wrapper-side pair counts).
    B2 = 10
    kf2, kl2 = jax.random.split(kl)
    features2 = jax.random.normal(kf2, (B2, D), dtype=jnp.float32)
    labels2 = jax.random.randint(kl2, (B2,), 0, 4, dtype=jnp.int32)
    loss2 = jax.block_until_ready(
        orthogonal_projection_loss(features2, labels2, gamma=0.5))
    ref2 = _reference(features2, labels2, gamma=0.5)
    assert jnp.allclose(loss2, ref2, atol=1e-5, rtol=1e-5), (loss2, ref2)

    print("KERNEL_OK")
</pallas_src>

<mosaic_0001>
module attributes {stable_mosaic.version = 11 : i64} {
  func.func @_normalize_kernel(%arg0: i32, %arg1: memref<8x32xf32, #tpu.memory_space<vmem>>, %arg2: memref<8x32xf32, #tpu.memory_space<vmem>>) attributes {dimension_semantics = [#tpu.dimension_semantics<parallel>], iteration_bounds = array<i64: 1>, scalar_prefetch = 0 : i64, scratch_operands = 0 : i64, tpu.core_type = #tpu.core_type<tc>, window_params = [{transform_indices = @transform_0, window_bounds = array<i64: 8, 32>}, {transform_indices = @transform_1, window_bounds = array<i64: 8, 32>}]} {
    %c0 = arith.constant 0 : index
    %c0_0 = arith.constant 0 : index
    %0 = vector.load %arg1[%c0, %c0_0] : memref<8x32xf32, #tpu.memory_space<vmem>>, vector<8x32xf32>
    %1 = arith.mulf %0, %0 : vector<8x32xf32>
    %cst = arith.constant dense<0.000000e+00> : vector<8xf32>
    %2 = vector.multi_reduction <add>, %1, %cst [1] : vector<8x32xf32> to vector<8xf32>
    %3 = vector.shape_cast %2 : vector<8xf32> to vector<8x1xf32>
    %cst_1 = arith.constant 1.000000e-24 : f32
    %4 = vector.broadcast %cst_1 : f32 to vector<8x1xf32>
    %5 = arith.maximumf %3, %4 : vector<8x1xf32>
    %6 = math.rsqrt %5 : vector<8x1xf32>
    %7 = vector.broadcast %6 : vector<8x1xf32> to vector<8x32xf32>
    %8 = arith.mulf %0, %7 : vector<8x32xf32>
    %c0_2 = arith.constant 0 : index
    %c0_3 = arith.constant 0 : index
    %9 = vector.load %arg2[%c0_2, %c0_3] : memref<8x32xf32, #tpu.memory_space<vmem>>, vector<8x32xf32>
    tpu.vector_store %arg2[%c0_2, %c0_3], %8 {strides = array<i32>} : memref<8x32xf32, #tpu.memory_space<vmem>>, vector<8x32xf32>,
    return
  }
  func.func @transform_0(%arg0: i32) -> (i32, i32) {
    %c0_i32 = arith.constant 0 : i32
    %c0_i32_0 = arith.constant 0 : i32
    return %arg0, %c0_i32 : i32, i32
  }
  func.func @transform_1(%arg0: i32) -> (i32, i32) {
    %c0_i32 = arith.constant 0 : i32
    %c0_i32_0 = arith.constant 0 : i32
    return %arg0, %c0_i32 : i32, i32
  }
}

</mosaic_0001>

<llo_original>
// kernel: tpu_custom_call.1
$region0: #{tpu_custom_call.1}
  #allocation0 [shape = 'u32[]', space=smem, size = 0x4, offset = 0x4, fixed_abs, tag = 'smem constant byte address 0x4 - core index']
  #allocation1 [shape = 'u32[144,128]{1,0:T(1,128)}', space=vmem, size = 0x12000, scoped, tag = 'internal scratch']
  %s0 = inlined_call_operand.hbm [shape: f32[8,32], index: 0, kind: input, shape index: {}]
  %s1 = inlined_call_operand.hbm [shape: f32[8,32], index: 1, kind: output, shape index: {}]
  %s2 = sld [smem:[#allocation0]]
  $region18: #{tpu_custom_call.1} parent=0
    _
  %s4 = ssub.s32 1, %s2
  %s5 = scalar_select 0, %s4, %s2
  $region1: #{tpu_custom_call.1} parent=0
    #allocation2 [shape = 'u8[4096]{0}', space=vmem, size = 0x1000, scoped, tag = 'input window, operand 0, single buffered']
    #allocation3 [shape = 's32[1]{0}', space=sflag, size = 0x4, scoped, tag = 'scoped memory for tpu_custom_call.1']
    #allocation4 [shape = 's32[1]{0}', space=sflag, size = 0x4, scoped, tag = 'scoped memory for tpu_custom_call.1']
    #allocation5 [shape = 'u8[4096]{0}', space=vmem, size = 0x1000, scoped, tag = 'output window, operand 0, single buffered']
    %6 = vsyncpa [#allocation3], 0
    %7 = vsyncpa [#allocation4], 0
    // Predicated region
    $region2: #{tpu_custom_call.1} parent=1 // pred_check
      _
    $region3: #{tpu_custom_call.1} parent=1 // pred_check_branch
      %9 = sbr.rel (0) target = $region5
    $region4: #{tpu_custom_call.1} parent=1 // pred_region
      %s11 = ssub.s32 128, 128
      %12 = vsyncadd [#allocation3], %s11
      %s14 = sshll.u32 [#allocation2], 4
      %s15 = int_to_ptr.vmem [resolvable:$true] %s14
      %17 = dma.hbm_to_vmem [thread:$0]  %s0, 128, %s15, [#allocation3]
    $region5: #{tpu_custom_call.1} parent=1 // pred_fallthru
      _
    // Predicated region
    $region6: #{tpu_custom_call.1} parent=1 // pred_check
      _
    $region7: #{tpu_custom_call.1} parent=1 // pred_check_branch
      %19 = sbr.rel (0) target = $region9
    $region8: #{tpu_custom_call.1} parent=1 // pred_region
      %20 = dma.done [#allocation3], 128
    $region9: #{tpu_custom_call.1} parent=1 // pred_fallthru
      _
    %v21 = vld [vmem:[#allocation2] sm:$0xff]
    %v22 = vmul.f32 %v21, %v21
    %vm23 = vcmask 261120
    %v24 = vsel %vm23, %v22, 0.0
    %25 = vadd.xlane.f32.xlu0 %v24
    %v26 = vpop.xlane.xlu0 %25
    %v27 = vmax.f32 %v26, 1e-24
    %v28 = vrsqrt.pop %v27
    %v29 = vmul.f32 %v21, %v28
    %30 = vst.msk [vmem:[#allocation5] sm:$0xff] %vm23, %v29
    // Predicated region
    $region10: #{tpu_custom_call.1} parent=1 // pred_check
      _
    $region11: #{tpu_custom_call.1} parent=1 // pred_check_branch
      %32 = sbr.rel (0) target = $region13
    $region12: #{tpu_custom_call.1} parent=1 // pred_region
      %s34 = ssub.s32 128, 128
      %35 = vsyncadd [#allocation4], %s34
      %s37 = sshll.u32 [#allocation5], 4
      %s38 = int_to_ptr.vmem [resolvable:$true] %s37
      %40 = dma.vmem_to_hbm [thread:$0]  %s38, 128, %s1, [#allocation4]
    $region13: #{tpu_custom_call.1} parent=1 // pred_fallthru
      _
    // Predicated region
    $region14: #{tpu_custom_call.1} parent=1 // pred_check
      _
    $region15: #{tpu_custom_call.1} parent=1 // pred_check_branch
      %42 = sbr.rel (0) target = $region17
    $region16: #{tpu_custom_call.1} parent=1 // pred_region
      %43 = dma.done [#allocation4], 128
    $region17: #{tpu_custom_call.1} parent=1 // pred_fallthru
      _
    %44 = vsyncpa [#allocation3], 1
    %45 = vsyncpa [#allocation4], 1

</llo_original>
